<compile_context>
chip_gen: v6e
topology: v6e:2x2x1
jax: 0.10.0
libtpu: 0.0.40
codegen_flags: <defaults>
</compile_context>

<pallas_src>
import functools

import jax
import jax.numpy as jnp
from jax.experimental import pallas as pl
from jax.experimental.pallas import tpu as pltpu


def _mlp_actor_kernel(x_ref, w1_ref, b1_ref, w2_ref, b2_ref, w3_ref, b3_ref,
                      wout_ref, bout_ref, probs_ref, logits_ref, *, n_valid):
    """Whole-network kernel: x -> fc1/relu -> fc2/relu -> fc3/relu -> out -> softmax."""
    x = x_ref[...]                                                     # (Bp, D)

    h = jnp.maximum(
        jnp.dot(x, w1_ref[...], preferred_element_type=jnp.float32) + b1_ref[...], 0.0)
    h = jnp.maximum(
        jnp.dot(h, w2_ref[...], preferred_element_type=jnp.float32) + b2_ref[...], 0.0)
    h = jnp.maximum(
        jnp.dot(h, w3_ref[...], preferred_element_type=jnp.float32) + b3_ref[...], 0.0)

    logits = (jnp.dot(h, wout_ref[...], preferred_element_type=jnp.float32)
              + bout_ref[...])                                         # (Bp, Ap)
    logits_ref[...] = logits

    # Softmax over the first `n_valid` lanes only (lanes >= n_valid are padding).
    lane = jax.lax.broadcasted_iota(jnp.int32, logits.shape, dimension=1)
    valid = lane < n_valid
    m = jnp.max(jnp.where(valid, logits, -jnp.inf), axis=-1, keepdims=True)
    e = jnp.where(valid, jnp.exp(logits - m), 0.0)
    s = jnp.sum(e, axis=-1, keepdims=True)
    r = pl.reciprocal(s, approx=True)          # EUP slot
    r = r * (2.0 - s * r)                      # one Newton step -> full f32 precision
    probs_ref[...] = e * r


def _round_up(n, m):
    return ((n + m - 1) // m) * m


@jax.jit
def bcmlp_actor_forward(x, w1_t, b1, w2_t, b2, w3_t, b3, wout_t, bout):
    """x: (B, input_size) float32.  Weights are pre-transposed (in, out).
    Returns (probs, logits), each (B, output_size)."""
    B, D = x.shape
    H = w1_t.shape[1]
    A = wout_t.shape[1]

    Bp = _round_up(B, 8)        # sublane-dense batch
    Ap = _round_up(A, 128)      # lane-dense output stores

    x_p = jnp.zeros((Bp, D), jnp.float32).at[:B].set(x)
    wout_p = jnp.zeros((H, Ap), jnp.float32).at[:, :A].set(wout_t)
    bout_p = jnp.zeros((1, Ap), jnp.float32).at[:, :A].set(bout.reshape(1, A))

    vmem = pl.BlockSpec(memory_space=pltpu.MemorySpace.VMEM)

    probs_p, logits_p = pl.pallas_call(
        functools.partial(_mlp_actor_kernel, n_valid=A),
        out_shape=(jax.ShapeDtypeStruct((Bp, Ap), jnp.float32),
                   jax.ShapeDtypeStruct((Bp, Ap), jnp.float32)),
        in_specs=[vmem] * 9,
        out_specs=(vmem, vmem),
    )(x_p, w1_t, b1.reshape(1, H), w2_t, b2.reshape(1, H), w3_t, b3.reshape(1, H),
      wout_p, bout_p)

    return probs_p[:B, :A], logits_p[:B, :A]


def _reference_forward(x, w1_t, b1, w2_t, b2, w3_t, b3, wout_t, bout):
    """Pure-JAX reference matching the PyTorch module semantics."""
    h = jax.nn.relu(x @ w1_t + b1)
    h = jax.nn.relu(h @ w2_t + b2)
    h = jax.nn.relu(h @ w3_t + b3)
    logits = h @ wout_t + bout
    probs = jax.nn.softmax(logits, axis=-1)
    return probs, logits


if __name__ == "__main__":
    # Small shapes consistent with the module: batch=4, input_size=16,
    # hidden_size=32, output_size=8.
    B, D, H, A = 4, 16, 32, 8

    key = jax.random.PRNGKey(0)
    k_x, k1, k2, k3, k4, k5, k6, k7, k8 = jax.random.split(key, 9)

    # Deterministic synthetic parameters, stored pre-transposed (in, out).
    # TODO(synk): orthogonal_init is a parameter-initialization detail and does
    # not affect the forward pass; plain uniform weights are used here.
    s1 = 1.0 / jnp.sqrt(jnp.float32(D))
    s2 = 1.0 / jnp.sqrt(jnp.float32(H))
    w1_t = jax.random.uniform(k1, (D, H), jnp.float32, -s1, s1)
    b1 = jax.random.uniform(k2, (H,), jnp.float32, -s1, s1)
    w2_t = jax.random.uniform(k3, (H, H), jnp.float32, -s2, s2)
    b2 = jax.random.uniform(k4, (H,), jnp.float32, -s2, s2)
    w3_t = jax.random.uniform(k5, (H, H), jnp.float32, -s2, s2)
    b3 = jax.random.uniform(k6, (H,), jnp.float32, -s2, s2)
    wout_t = jax.random.uniform(k7, (H, A), jnp.float32, -s2, s2)
    bout = jax.random.uniform(k8, (A,), jnp.float32, -s2, s2)

    x = jax.random.normal(k_x, (B, D), jnp.float32)

    probs, logits = bcmlp_actor_forward(x, w1_t, b1, w2_t, b2, w3_t, b3, wout_t, bout)
    jax.block_until_ready((probs, logits))

    probs_ref, logits_ref = _reference_forward(x, w1_t, b1, w2_t, b2, w3_t, b3,
                                               wout_t, bout)
    assert probs.shape == (B, A) and logits.shape == (B, A)
    assert jnp.allclose(logits, logits_ref, atol=1e-4, rtol=1e-4)
    assert jnp.allclose(probs, probs_ref, atol=1e-4, rtol=1e-4)
    assert jnp.allclose(jnp.sum(probs, axis=-1), 1.0, atol=1e-5)

    print("KERNEL_OK")
</pallas_src>

<mosaic_0001>
module attributes {stable_mosaic.version = 11 : i64} {
  func.func @_mlp_actor_kernel(%arg0: memref<8x16xf32, #tpu.memory_space<vmem>>, %arg1: memref<16x32xf32, #tpu.memory_space<vmem>>, %arg2: memref<1x32xf32, #tpu.memory_space<vmem>>, %arg3: memref<32x32xf32, #tpu.memory_space<vmem>>, %arg4: memref<1x32xf32, #tpu.memory_space<vmem>>, %arg5: memref<32x32xf32, #tpu.memory_space<vmem>>, %arg6: memref<1x32xf32, #tpu.memory_space<vmem>>, %arg7: memref<32x128xf32, #tpu.memory_space<vmem>>, %arg8: memref<1x128xf32, #tpu.memory_space<vmem>>, %arg9: memref<8x128xf32, #tpu.memory_space<vmem>>, %arg10: memref<8x128xf32, #tpu.memory_space<vmem>>) attributes {dimension_semantics = [], scalar_prefetch = 0 : i64, scratch_operands = 0 : i64, tpu.core_type = #tpu.core_type<tc>} {
    %c0 = arith.constant 0 : index
    %c0_0 = arith.constant 0 : index
    %0 = vector.load %arg0[%c0, %c0_0] : memref<8x16xf32, #tpu.memory_space<vmem>>, vector<8x16xf32>
    %c0_1 = arith.constant 0 : index
    %c0_2 = arith.constant 0 : index
    %1 = vector.load %arg1[%c0_1, %c0_2] : memref<16x32xf32, #tpu.memory_space<vmem>>, vector<16x32xf32>
    %cst = arith.constant dense<0.000000e+00> : vector<8x32xf32>
    %2 = tpu.matmul %0, %1, %cst {dimension_numbers = #tpu.dot_dimension_numbers<[1], [0], [0], [1], [0, 0, 1, 1], [], []>} : vector<8x16xf32>, vector<16x32xf32>, vector<8x32xf32> -> vector<8x32xf32>
    %c0_3 = arith.constant 0 : index
    %c0_4 = arith.constant 0 : index
    %3 = vector.load %arg2[%c0_3, %c0_4] : memref<1x32xf32, #tpu.memory_space<vmem>>, vector<1x32xf32>
    %4 = vector.broadcast %3 : vector<1x32xf32> to vector<8x32xf32>
    %5 = arith.addf %2, %4 : vector<8x32xf32>
    %cst_5 = arith.constant 0.000000e+00 : f32
    %6 = vector.broadcast %cst_5 : f32 to vector<8x32xf32>
    %7 = arith.maximumf %5, %6 : vector<8x32xf32>
    %c0_6 = arith.constant 0 : index
    %c0_7 = arith.constant 0 : index
    %8 = vector.load %arg3[%c0_6, %c0_7] : memref<32x32xf32, #tpu.memory_space<vmem>>, vector<32x32xf32>
    %cst_8 = arith.constant dense<0.000000e+00> : vector<8x32xf32>
    %9 = tpu.matmul %7, %8, %cst_8 {dimension_numbers = #tpu.dot_dimension_numbers<[1], [0], [0], [1], [0, 0, 1, 1], [], []>} : vector<8x32xf32>, vector<32x32xf32>, vector<8x32xf32> -> vector<8x32xf32>
    %c0_9 = arith.constant 0 : index
    %c0_10 = arith.constant 0 : index
    %10 = vector.load %arg4[%c0_9, %c0_10] : memref<1x32xf32, #tpu.memory_space<vmem>>, vector<1x32xf32>
    %11 = vector.broadcast %10 : vector<1x32xf32> to vector<8x32xf32>
    %12 = arith.addf %9, %11 : vector<8x32xf32>
    %cst_11 = arith.constant 0.000000e+00 : f32
    %13 = vector.broadcast %cst_11 : f32 to vector<8x32xf32>
    %14 = arith.maximumf %12, %13 : vector<8x32xf32>
    %c0_12 = arith.constant 0 : index
    %c0_13 = arith.constant 0 : index
    %15 = vector.load %arg5[%c0_12, %c0_13] : memref<32x32xf32, #tpu.memory_space<vmem>>, vector<32x32xf32>
    %cst_14 = arith.constant dense<0.000000e+00> : vector<8x32xf32>
    %16 = tpu.matmul %14, %15, %cst_14 {dimension_numbers = #tpu.dot_dimension_numbers<[1], [0], [0], [1], [0, 0, 1, 1], [], []>} : vector<8x32xf32>, vector<32x32xf32>, vector<8x32xf32> -> vector<8x32xf32>
    %c0_15 = arith.constant 0 : index
    %c0_16 = arith.constant 0 : index
    %17 = vector.load %arg6[%c0_15, %c0_16] : memref<1x32xf32, #tpu.memory_space<vmem>>, vector<1x32xf32>
    %18 = vector.broadcast %17 : vector<1x32xf32> to vector<8x32xf32>
    %19 = arith.addf %16, %18 : vector<8x32xf32>
    %cst_17 = arith.constant 0.000000e+00 : f32
    %20 = vector.broadcast %cst_17 : f32 to vector<8x32xf32>
    %21 = arith.maximumf %19, %20 : vector<8x32xf32>
    %c0_18 = arith.constant 0 : index
    %c0_19 = arith.constant 0 : index
    %22 = vector.load %arg7[%c0_18, %c0_19] : memref<32x128xf32, #tpu.memory_space<vmem>>, vector<32x128xf32>
    %cst_20 = arith.constant dense<0.000000e+00> : vector<8x128xf32>
    %23 = tpu.matmul %21, %22, %cst_20 {dimension_numbers = #tpu.dot_dimension_numbers<[1], [0], [0], [1], [0, 0, 1, 1], [], []>} : vector<8x32xf32>, vector<32x128xf32>, vector<8x128xf32> -> vector<8x128xf32>
    %c0_21 = arith.constant 0 : index
    %c0_22 = arith.constant 0 : index
    %24 = vector.load %arg8[%c0_21, %c0_22] : memref<1x128xf32, #tpu.memory_space<vmem>>, vector<1x128xf32>
    %25 = vector.broadcast %24 : vector<1x128xf32> to vector<8x128xf32>
    %26 = arith.addf %23, %25 : vector<8x128xf32>
    %c0_23 = arith.constant 0 : index
    %c0_24 = arith.constant 0 : index
    %27 = vector.load %arg10[%c0_23, %c0_24] : memref<8x128xf32, #tpu.memory_space<vmem>>, vector<8x128xf32>
    tpu.vector_store %arg10[%c0_23, %c0_24], %26 {strides = array<i32>} : memref<8x128xf32, #tpu.memory_space<vmem>>, vector<8x128xf32>,
    %28 = tpu.iota {dimensions = array<i32: 1>} : vector<8x128xi32>
    %c8_i32 = arith.constant 8 : i32
    %29 = vector.broadcast %c8_i32 : i32 to vector<8x128xi32>
    %30 = arith.cmpi slt, %28, %29 : vector<8x128xi32>
    %cst_25 = arith.constant 0xFF800000 : f32
    %31 = vector.broadcast %cst_25 : f32 to vector<8x128xf32>
    %32 = arith.select %30, %26, %31 : vector<8x128xi1>, vector<8x128xf32>
    %cst_26 = arith.constant dense<0xFF800000> : vector<8xf32>
    %33 = vector.multi_reduction <maximumf>, %32, %cst_26 [1] : vector<8x128xf32> to vector<8xf32>
    %34 = vector.shape_cast %33 : vector<8xf32> to vector<8x1xf32>
    %35 = vector.broadcast %34 : vector<8x1xf32> to vector<8x128xf32>
    %36 = arith.subf %26, %35 : vector<8x128xf32>
    %37 = math.exp %36 : vector<8x128xf32>
    %cst_27 = arith.constant 0.000000e+00 : f32
    %38 = vector.broadcast %cst_27 : f32 to vector<8x128xf32>
    %39 = arith.select %30, %37, %38 : vector<8x128xi1>, vector<8x128xf32>
    %cst_28 = arith.constant dense<0.000000e+00> : vector<8xf32>
    %40 = vector.multi_reduction <add>, %39, %cst_28 [1] : vector<8x128xf32> to vector<8xf32>
    %41 = vector.shape_cast %40 : vector<8xf32> to vector<8x1xf32>
    %42 = tpu.reciprocal %41 {approx = true} : vector<8x1xf32> -> vector<8x1xf32>
    %43 = arith.mulf %41, %42 : vector<8x1xf32>
    %cst_29 = arith.constant 2.000000e+00 : f32
    %44 = vector.broadcast %cst_29 : f32 to vector<8x1xf32>
    %45 = arith.subf %44, %43 : vector<8x1xf32>
    %46 = arith.mulf %42, %45 : vector<8x1xf32>
    %47 = vector.broadcast %46 : vector<8x1xf32> to vector<8x128xf32>
    %48 = arith.mulf %39, %47 : vector<8x128xf32>
    %c0_30 = arith.constant 0 : index
    %c0_31 = arith.constant 0 : index
    %49 = vector.load %arg9[%c0_30, %c0_31] : memref<8x128xf32, #tpu.memory_space<vmem>>, vector<8x128xf32>
    tpu.vector_store %arg9[%c0_30, %c0_31], %48 {strides = array<i32>} : memref<8x128xf32, #tpu.memory_space<vmem>>, vector<8x128xf32>,
    return
  }
}

</mosaic_0001>

<llo_original>
// kernel: bcmlp_actor_forward.1
$region0: #{bcmlp_actor_forward.1}
  #allocation0 [shape = 'u32[]', space=smem, size = 0x4, offset = 0x4, fixed_abs, tag = 'smem constant byte address 0x4 - core index']
  #allocation1 [shape = 'u32[144,128]{1,0:T(1,128)}', space=vmem, size = 0x12000, scoped, tag = 'internal scratch']
  %s0 = inlined_call_operand.vmem [shape: f32[8,16], index: 0, kind: input, shape index: {}]
  %s1 = inlined_call_operand.vmem [shape: f32[16,32], index: 1, kind: input, shape index: {}]
  %s2 = inlined_call_operand.vmem [shape: f32[1,32], index: 2, kind: input, shape index: {}]
  %s3 = inlined_call_operand.vmem [shape: f32[32,32], index: 3, kind: input, shape index: {}]
  %s4 = inlined_call_operand.vmem [shape: f32[1,32], index: 4, kind: input, shape index: {}]
  %s5 = inlined_call_operand.vmem [shape: f32[32,32], index: 5, kind: input, shape index: {}]
  %s6 = inlined_call_operand.vmem [shape: f32[1,32], index: 6, kind: input, shape index: {}]
  %s7 = inlined_call_operand.vmem [shape: f32[32,128], index: 7, kind: input, shape index: {}]
  %s8 = inlined_call_operand.vmem [shape: f32[1,128], index: 8, kind: input, shape index: {}]
  %s9 = inlined_call_operand.vmem [shape: f32[8,128], index: 9, kind: output, shape index: {0}]
  %s10 = inlined_call_operand.vmem [shape: f32[8,128], index: 10, kind: output, shape index: {1}]
  %11 = xla_tuple %s9, %s10
  %s12 = sld [smem:[#allocation0]]
  $region54: #{bcmlp_actor_forward.1} parent=0
    _
  %s14 = ssub.s32 1, %s12
  %s15 = scalar_select 0, %s14, %s12
  // Predicated region
  $region2: #{bcmlp_actor_forward.1} parent=0 // pred_check
    _
  $region3: #{bcmlp_actor_forward.1} parent=0 // pred_check_branch
    %17 = sbr.rel (0) target = $region5
  $region4: #{bcmlp_actor_forward.1} parent=0 // pred_region
    _
  $region5: #{bcmlp_actor_forward.1} parent=0 // pred_fallthru
    _
  // Predicated region
  $region6: #{bcmlp_actor_forward.1} parent=0 // pred_check
    _
  $region7: #{bcmlp_actor_forward.1} parent=0 // pred_check_branch
    %19 = sbr.rel (0) target = $region9
  $region8: #{bcmlp_actor_forward.1} parent=0 // pred_region
    _
  $region9: #{bcmlp_actor_forward.1} parent=0 // pred_fallthru
    _
  // Predicated region
  $region10: #{bcmlp_actor_forward.1} parent=0 // pred_check
    _
  $region11: #{bcmlp_actor_forward.1} parent=0 // pred_check_branch
    %21 = sbr.rel (0) target = $region13
  $region12: #{bcmlp_actor_forward.1} parent=0 // pred_region
    _
  $region13: #{bcmlp_actor_forward.1} parent=0 // pred_fallthru
    _
  // Predicated region
  $region14: #{bcmlp_actor_forward.1} parent=0 // pred_check
    _
  $region15: #{bcmlp_actor_forward.1} parent=0 // pred_check_branch
    %23 = sbr.rel (0) target = $region17
  $region16: #{bcmlp_actor_forward.1} parent=0 // pred_region
    _
  $region17: #{bcmlp_actor_forward.1} parent=0 // pred_fallthru
    _
  // Predicated region
  $region18: #{bcmlp_actor_forward.1} parent=0 // pred_check
    _
  $region19: #{bcmlp_actor_forward.1} parent=0 // pred_check_branch
    %25 = sbr.rel (0) target = $region21
  $region20: #{bcmlp_actor_forward.1} parent=0 // pred_region
    _
  $region21: #{bcmlp_actor_forward.1} parent=0 // pred_fallthru
    _
  // Predicated region
  $region22: #{bcmlp_actor_forward.1} parent=0 // pred_check
    _
  $region23: #{bcmlp_actor_forward.1} parent=0 // pred_check_branch
    %27 = sbr.rel (0) target = $region25
  $region24: #{bcmlp_actor_forward.1} parent=0 // pred_region
    _
  $region25: #{bcmlp_actor_forward.1} parent=0 // pred_fallthru
    _
  // Predicated region
  $region26: #{bcmlp_actor_forward.1} parent=0 // pred_check
    _
  $region27: #{bcmlp_actor_forward.1} parent=0 // pred_check_branch
    %29 = sbr.rel (0) target = $region29
  $region28: #{bcmlp_actor_forward.1} parent=0 // pred_region
    _
  $region29: #{bcmlp_actor_forward.1} parent=0 // pred_fallthru
    _
  // Predicated region
  $region30: #{bcmlp_actor_forward.1} parent=0 // pred_check
    _
  $region31: #{bcmlp_actor_forward.1} parent=0 // pred_check_branch
    %31 = sbr.rel (0) target = $region33
  $region32: #{bcmlp_actor_forward.1} parent=0 // pred_region
    _
  $region33: #{bcmlp_actor_forward.1} parent=0 // pred_fallthru
    _
  // Predicated region
  $region34: #{bcmlp_actor_forward.1} parent=0 // pred_check
    _
  $region35: #{bcmlp_actor_forward.1} parent=0 // pred_check_branch
    %33 = sbr.rel (0) target = $region37
  $region36: #{bcmlp_actor_forward.1} parent=0 // pred_region
    _
  $region37: #{bcmlp_actor_forward.1} parent=0 // pred_fallthru
    _
  %v34 = vld [vmem:[%s0] sm:$0xff]
  %v35 = vld [vmem:[%s1] sm:$0xff]
  %v36 = vld [vmem:[%s1 + $0x8] sm:$0xff]
  %v37 = vld [vmem:[%s2] sm:$0x1]
  %v39 = vlaneseq
  %v40 = vshrl.u32 %v39, 7
  %v41 = vsub.s32 0, %v40
  %v42 = vrot.slane %v37, %v41
  %vm44 = vcmask 130048
  %v46 = vsel %vm44, %v34, 0
  %48 = vmatprep.subr.mxu0 0.0
  %49 = vmatpush1.msra.mxu0 0.0
  %50 = vmatprep.subr.mxu0 0.0
  %51 = vmatpush1.msra.mxu0 0.0
  %52 = vmatprep.subr.mxu0 0.0
  %53 = vmatpush1.msra.mxu0 0.0
  %54 = vmatprep.subr.mxu0 0.0
  %55 = vmatpush1.msra.mxu0 0.0
  %56 = vmatprep.subr.mxu0 0.0
  %57 = vmatpush1.msra.mxu0 0.0
  %58 = vmatprep.subr.mxu0 0.0
  %59 = vmatpush1.msra.mxu0 0.0
  %60 = vmatprep.subr.mxu0 0.0
  %61 = vmatpush1.msra.mxu0 0.0
  %62 = vmatprep.subr.mxu0 0.0
  %63 = vmatpush1.msra.mxu0 0.0
  %64 = vmatprep.subr.mxu0 0.0
  %65 = vmatpush1.msra.mxu0 0.0
  %66 = vmatprep.subr.mxu0 0.0
  %67 = vmatpush1.msra.mxu0 0.0
  %68 = vmatprep.subr.mxu0 0.0
  %69 = vmatpush1.msra.mxu0 0.0
  %70 = vmatprep.subr.mxu0 0.0
  %71 = vmatpush1.msra.mxu0 0.0
  %72 = vmatprep.subr.mxu0 0.0
  %73 = vmatpush1.msra.mxu0 0.0
  %74 = vmatprep.subr.mxu0 0.0
  %75 = vmatpush1.msra.mxu0 0.0
  %76 = vmatprep.subr.mxu0 0.0
  %77 = vmatpush1.msra.mxu0 %v36
  %78 = vmatprep.subr.mxu0 0.0
  %79 = vmatpush1.msra.mxu0 %v35
  %80 = vmatprep.subr.mxu0 0.0
  %81 = vmatpush2.msra.mxu0 0.0
  %82 = vmatprep.subr.mxu0 0.0
  %83 = vmatpush2.msra.mxu0 0.0
  %84 = vmatprep.subr.mxu0 0.0
  %85 = vmatpush2.msra.mxu0 0.0
  %86 = vmatprep.subr.mxu0 0.0
  %87 = vmatpush2.msra.mxu0 0.0
  %88 = vmatprep.subr.mxu0 0.0
  %89 = vmatpush2.msra.mxu0 0.0
  %90 = vmatprep.subr.mxu0 0.0
  %91 = vmatpush2.msra.mxu0 0.0
  %92 = vmatprep.subr.mxu0 0.0
  %93 = vmatpush2.msra.mxu0 0.0
  %94 = vmatprep.subr.mxu0 0.0
  %95 = vmatpush2.msra.mxu0 0.0
  %96 = vmatprep.subr.mxu0 0.0
  %97 = vmatpush2.msra.mxu0 0.0
  %98 = vmatprep.subr.mxu0 0.0
  %99 = vmatpush2.msra.mxu0 0.0
  %100 = vmatprep.subr.mxu0 0.0
  %101 = vmatpush2.msra.mxu0 0.0
  %102 = vmatprep.subr.mxu0 0.0
  %103 = vmatpush2.msra.mxu0 0.0
  %104 = vmatprep.subr.mxu0 0.0
  %105 = vmatpush2.msra.mxu0 0.0
  %106 = vmatprep.subr.mxu0 0.0
  %107 = vmatpush2.msra.mxu0 0.0
  %108 = vmatprep.subr.mxu0 0.0
  %109 = vmatpush2.msra.mxu0 0.0
  %110 = vmatprep.subr.mxu0 0.0
  %111 = vmatpush2.msra.mxu0 0.0
  %112 = vmatprep.mubr.f32.mxu0 0.0
  %113 = vmatmul.mubr.f32.gmra.mxu0 %v46
  %v114 = vpop.f32.mrf.mxu0
  %v115 = vadd.f32 %v42, %v114
  %v116 = vpop.f32.mrf.mxu0
  %117 = vdwg.mxu0
  %v118 = vmax.f32 %v115, 0.0
  %v119 = vld [vmem:[%s3] sm:$0xff]
  %v120 = vld [vmem:[%s3 + $0x8] sm:$0xff]
  %v121 = vld [vmem:[%s3 + $0x10] sm:$0xff]
  %v122 = vld [vmem:[%s3 + $0x18] sm:$0xff]
  %v123 = vld [vmem:[%s4] sm:$0x1]
  %v125 = vlaneseq
  %v126 = vshrl.u32 %v125, 7
  %v127 = vsub.s32 0, %v126
  %v128 = vrot.slane %v123, %v127
  %vm130 = vcmask 261120
  %v132 = vsel %vm130, %v118, 0
  %134 = vmatprep.subr.mxu0 0.0
  %135 = vmatpush1.msra.mxu0 0.0
  %136 = vmatprep.subr.mxu0 0.0
  %137 = vmatpush1.msra.mxu0 0.0
  %138 = vmatprep.subr.mxu0 0.0
  %139 = vmatpush1.msra.mxu0 0.0
  %140 = vmatprep.subr.mxu0 0.0
  %141 = vmatpush1.msra.mxu0 0.0
  %142 = vmatprep.subr.mxu0 0.0
  %143 = vmatpush1.msra.mxu0 0.0
  %144 = vmatprep.subr.mxu0 0.0
  %145 = vmatpush1.msra.mxu0 0.0
  %146 = vmatprep.subr.mxu0 0.0
  %147 = vmatpush1.msra.mxu0 0.0
  %148 = vmatprep.subr.mxu0 0.0
  %149 = vmatpush1.msra.mxu0 0.0
  %150 = vmatprep.subr.mxu0 0.0
  %151 = vmatpush1.msra.mxu0 0.0
  %152 = vmatprep.subr.mxu0 0.0
  %153 = vmatpush1.msra.mxu0 0.0
  %154 = vmatprep.subr.mxu0 0.0
  %155 = vmatpush1.msra.mxu0 0.0
  %156 = vmatprep.subr.mxu0 0.0
  %157 = vmatpush1.msra.mxu0 0.0
  %158 = vmatprep.subr.mxu0 0.0
  %159 = vmatpush1.msra.mxu0 %v122
  %160 = vmatprep.subr.mxu0 0.0
  %161 = vmatpush1.msra.mxu0 %v121
  %162 = vmatprep.subr.mxu0 0.0
  %163 = vmatpush1.msra.mxu0 %v120
  %164 = vmatprep.subr.mxu0 0.0
  %165 = vmatpush1.msra.mxu0 %v119
  %166 = vmatprep.subr.mxu0 0.0
  %167 = vmatpush2.msra.mxu0 0.0
  %168 = vmatprep.subr.mxu0 0.0
  %169 = vmatpush2.msra.mxu0 0.0
  %170 = vmatprep.subr.mxu0 0.0
  %171 = vmatpush2.msra.mxu0 0.0
  %172 = vmatprep.subr.mxu0 0.0
  %173 = vmatpush2.msra.mxu0 0.0
  %174 = vmatprep.subr.mxu0 0.0
  %175 = vmatpush2.msra.mxu0 0.0
  %176 = vmatprep.subr.mxu0 0.0
  %177 = vmatpush2.msra.mxu0 0.0
  %178 = vmatprep.subr.mxu0 0.0
  %179 = vmatpush2.msra.mxu0 0.0
  %180 = vmatprep.subr.mxu0 0.0
  %181 = vmatpush2.msra.mxu0 0.0
  %182 = vmatprep.subr.mxu0 0.0
  %183 = vmatpush2.msra.mxu0 0.0
  %184 = vmatprep.subr.mxu0 0.0
  %185 = vmatpush2.msra.mxu0 0.0
  %186 = vmatprep.subr.mxu0 0.0
  %187 = vmatpush2.msra.mxu0 0.0
  %188 = vmatprep.subr.mxu0 0.0
  %189 = vmatpush2.msra.mxu0 0.0
  %190 = vmatprep.subr.mxu0 0.0
  %191 = vmatpush2.msra.mxu0 0.0
  %192 = vmatprep.subr.mxu0 0.0
  %193 = vmatpush2.msra.mxu0 0.0
  %194 = vmatprep.subr.mxu0 0.0
  %195 = vmatpush2.msra.mxu0 0.0
  %196 = vmatprep.subr.mxu0 0.0
  %197 = vmatpush2.msra.mxu0 0.0
  %198 = vmatprep.mubr.f32.mxu0 0.0
  %199 = vmatmul.mubr.f32.gmra.mxu0 %v132
  %v200 = vpop.f32.mrf.mxu0
  %v201 = vadd.f32 %v128, %v200
  %v202 = vpop.f32.mrf.mxu0
  %203 = vdwg.mxu0
  %v204 = vmax.f32 %v201, 0.0
  %v205 = vld [vmem:[%s5] sm:$0xff]
  %v206 = vld [vmem:[%s5 + $0x8] sm:$0xff]
  %v207 = vld [vmem:[%s5 + $0x10] sm:$0xff]
  %v208 = vld [vmem:[%s5 + $0x18] sm:$0xff]
  %v209 = vld [vmem:[%s6] sm:$0x1]
  %v211 = vlaneseq
  %v212 = vshrl.u32 %v211, 7
  %v213 = vsub.s32 0, %v212
  %v214 = vrot.slane %v209, %v213
  %v217 = vsel %vm130, %v204, 0
  %219 = vmatprep.subr.mxu0 0.0
  %220 = vmatpush1.msra.mxu0 0.0
  %221 = vmatprep.subr.mxu0 0.0
  %222 = vmatpush1.msra.mxu0 0.0
  %223 = vmatprep.subr.mxu0 0.0
  %224 = vmatpush1.msra.mxu0 0.0
  %225 = vmatprep.subr.mxu0 0.0
  %226 = vmatpush1.msra.mxu0 0.0
  %227 = vmatprep.subr.mxu0 0.0
  %228 = vmatpush1.msra.mxu0 0.0
  %229 = vmatprep.subr.mxu0 0.0
  %230 = vmatpush1.msra.mxu0 0.0
  %231 = vmatprep.subr.mxu0 0.0
  %232 = vmatpush1.msra.mxu0 0.0
  %233 = vmatprep.subr.mxu0 0.0
  %234 = vmatpush1.msra.mxu0 0.0
  %235 = vmatprep.subr.mxu0 0.0
  %236 = vmatpush1.msra.mxu0 0.0
  %237 = vmatprep.subr.mxu0 0.0
  %238 = vmatpush1.msra.mxu0 0.0
  %239 = vmatprep.subr.mxu0 0.0
  %240 = vmatpush1.msra.mxu0 0.0
  %241 = vmatprep.subr.mxu0 0.0
  %242 = vmatpush1.msra.mxu0 0.0
  %243 = vmatprep.subr.mxu0 0.0
  %244 = vmatpush1.msra.mxu0 %v208
  %245 = vmatprep.subr.mxu0 0.0
  %246 = vmatpush1.msra.mxu0 %v207
  %247 = vmatprep.subr.mxu0 0.0
  %248 = vmatpush1.msra.mxu0 %v206
  %249 = vmatprep.subr.mxu0 0.0
  %250 = vmatpush1.msra.mxu0 %v205
  %251 = vmatprep.subr.mxu0 0.0
  %252 = vmatpush2.msra.mxu0 0.0
  %253 = vmatprep.subr.mxu0 0.0
  %254 = vmatpush2.msra.mxu0 0.0
  %255 = vmatprep.subr.mxu0 0.0
  %256 = vmatpush2.msra.mxu0 0.0
  %257 = vmatprep.subr.mxu0 0.0
  %258 = vmatpush2.msra.mxu0 0.0
  %259 = vmatprep.subr.mxu0 0.0
  %260 = vmatpush2.msra.mxu0 0.0
  %261 = vmatprep.subr.mxu0 0.0
  %262 = vmatpush2.msra.mxu0 0.0
  %263 = vmatprep.subr.mxu0 0.0
  %264 = vmatpush2.msra.mxu0 0.0
  %265 = vmatprep.subr.mxu0 0.0
  %266 = vmatpush2.msra.mxu0 0.0
  %267 = vmatprep.subr.mxu0 0.0
  %268 = vmatpush2.msra.mxu0 0.0
  %269 = vmatprep.subr.mxu0 0.0
  %270 = vmatpush2.msra.mxu0 0.0
  %271 = vmatprep.subr.mxu0 0.0
  %272 = vmatpush2.msra.mxu0 0.0
  %273 = vmatprep.subr.mxu0 0.0
  %274 = vmatpush2.msra.mxu0 0.0
  %275 = vmatprep.subr.mxu0 0.0
  %276 = vmatpush2.msra.mxu0 0.0
  %277 = vmatprep.subr.mxu0 0.0
  %278 = vmatpush2.msra.mxu0 0.0
  %279 = vmatprep.subr.mxu0 0.0
  %280 = vmatpush2.msra.mxu0 0.0
  %281 = vmatprep.subr.mxu0 0.0
  %282 = vmatpush2.msra.mxu0 0.0
  %283 = vmatprep.mubr.f32.mxu0 0.0
  %284 = vmatmul.mubr.f32.gmra.mxu0 %v217
  %v285 = vpop.f32.mrf.mxu0
  %v286 = vadd.f32 %v214, %v285
  %v287 = vpop.f32.mrf.mxu0
  %288 = vdwg.mxu0
  %v289 = vmax.f32 %v286, 0.0
  %v290 = vld [vmem:[%s7] sm:$0xff]
  %v291 = vld [vmem:[%s7 + $0x8] sm:$0xff]
  %v292 = vld [vmem:[%s7 + $0x10] sm:$0xff]
  %v293 = vld [vmem:[%s7 + $0x18] sm:$0xff]
  %v294 = vld [vmem:[%s8] sm:$0x1]
  %v296 = vlaneseq
  %v297 = vshrl.u32 %v296, 7
  %v298 = vsub.s32 0, %v297
  %v299 = vrot.slane %v294, %v298
  %v302 = vsel %vm130, %v289, 0
  %304 = vmatprep.subr.mxu0 0.0
  %305 = vmatpush1.msra.mxu0 0.0
  %306 = vmatprep.subr.mxu0 0.0
  %307 = vmatpush1.msra.mxu0 0.0
  %308 = vmatprep.subr.mxu0 0.0
  %309 = vmatpush1.msra.mxu0 0.0
  %310 = vmatprep.subr.mxu0 0.0
  %311 = vmatpush1.msra.mxu0 0.0
  %312 = vmatprep.subr.mxu0 0.0
  %313 = vmatpush1.msra.mxu0 0.0
  %314 = vmatprep.subr.mxu0 0.0
  %315 = vmatpush1.msra.mxu0 0.0
  %316 = vmatprep.subr.mxu0 0.0
  %317 = vmatpush1.msra.mxu0 0.0
  %318 = vmatprep.subr.mxu0 0.0
  %319 = vmatpush1.msra.mxu0 0.0
  %320 = vmatprep.subr.mxu0 0.0
  %321 = vmatpush1.msra.mxu0 0.0
  %322 = vmatprep.subr.mxu0 0.0
  %323 = vmatpush1.msra.mxu0 0.0
  %324 = vmatprep.subr.mxu0 0.0
  %325 = vmatpush1.msra.mxu0 0.0
  %326 = vmatprep.subr.mxu0 0.0
  %327 = vmatpush1.msra.mxu0 0.0
  %328 = vmatprep.subr.mxu0 0.0
  %329 = vmatpush1.msra.mxu0 %v293
  %330 = vmatprep.subr.mxu0 0.0
  %331 = vmatpush1.msra.mxu0 %v292
  %332 = vmatprep.subr.mxu0 0.0
  %333 = vmatpush1.msra.mxu0 %v291
  %334 = vmatprep.subr.mxu0 0.0
  %335 = vmatpush1.msra.mxu0 %v290
  %336 = vmatprep.subr.mxu0 0.0
  %337 = vmatpush2.msra.mxu0 0.0
  %338 = vmatprep.subr.mxu0 0.0
  %339 = vmatpush2.msra.mxu0 0.0
  %340 = vmatprep.subr.mxu0 0.0
  %341 = vmatpush2.msra.mxu0 0.0
  %342 = vmatprep.subr.mxu0 0.0
  %343 = vmatpush2.msra.mxu0 0.0
  %344 = vmatprep.subr.mxu0 0.0
  %345 = vmatpush2.msra.mxu0 0.0
  %346 = vmatprep.subr.mxu0 0.0
  %347 = vmatpush2.msra.mxu0 0.0
  %348 = vmatprep.subr.mxu0 0.0
  %349 = vmatpush2.msra.mxu0 0.0
  %350 = vmatprep.subr.mxu0 0.0
  %351 = vmatpush2.msra.mxu0 0.0
  %352 = vmatprep.subr.mxu0 0.0
  %353 = vmatpush2.msra.mxu0 0.0
  %354 = vmatprep.subr.mxu0 0.0
  %355 = vmatpush2.msra.mxu0 0.0
  %356 = vmatprep.subr.mxu0 0.0
  %357 = vmatpush2.msra.mxu0 0.0
  %358 = vmatprep.subr.mxu0 0.0
  %359 = vmatpush2.msra.mxu0 0.0
  %360 = vmatprep.subr.mxu0 0.0
  %361 = vmatpush2.msra.mxu0 0.0
  %362 = vmatprep.subr.mxu0 0.0
  %363 = vmatpush2.msra.mxu0 0.0
  %364 = vmatprep.subr.mxu0 0.0
  %365 = vmatpush2.msra.mxu0 0.0
  %366 = vmatprep.subr.mxu0 0.0
  %367 = vmatpush2.msra.mxu0 0.0
  %368 = vmatprep.mubr.f32.mxu0 0.0
  %369 = vmatmul.mubr.f32.gmra.mxu0 %v302
  %v370 = vpop.f32.mrf.mxu0
  %v371 = vadd.f32 %v299, %v370
  %v372 = vpop.f32.mrf.mxu0
  %373 = vdwg.mxu0
  %374 = vst [vmem:[%s10] sm:$0xff] %v371
  %v375 = vlaneseq
  %v376 = vand.u32 %v375, 127
  %vm377 = vcmp.lt.s32.totalorder %v376, 8
  %v378 = vsel %vm377, %v371, -inf
  %379 = vmax.xlane.f32.xlu0 %v378
  %v380 = vpop.xlane.xlu0 %379
  %v381 = vsub.f32 %v371, %v380
  %v382 = vmul.f32 %v381, 1.442695
  %v383 = vpow.pop %v382
  %v384 = vsel %vm377, %v383, 0.0
  %385 = vadd.xlane.f32.xlu0 %v384
  %v386 = vpop.xlane.xlu0 %385
  %v387 = vrcp.pop %v386
  %v388 = vmul.f32 %v386, %v387
  %v389 = vsub.f32 2.0, %v388
  %v390 = vmul.f32 %v387, %v389
  %v391 = vmul.f32 %v384, %v390
  %392 = vst [vmem:[%s9] sm:$0xff] %v391
  // Predicated region
  $region38: #{bcmlp_actor_forward.1} parent=0 // pred_check
    _
  $region39: #{bcmlp_actor_forward.1} parent=0 // pred_check_branch
    %394 = sbr.rel (0) target = $region41
  $region40: #{bcmlp_actor_forward.1} parent=0 // pred_region
    _
  $region41: #{bcmlp_actor_forward.1} parent=0 // pred_fallthru
    _
  // Predicated region
  $region42: #{bcmlp_actor_forward.1} parent=0 // pred_check
    _
  $region43: #{bcmlp_actor_forward.1} parent=0 // pred_check_branch
    %396 = sbr.rel (0) target = $region45
  $region44: #{bcmlp_actor_forward.1} parent=0 // pred_region
    _
  $region45: #{bcmlp_actor_forward.1} parent=0 // pred_fallthru
    _
  // Predicated region
  $region46: #{bcmlp_actor_forward.1} parent=0 // pred_check
    _
  $region47: #{bcmlp_actor_forward.1} parent=0 // pred_check_branch
    %398 = sbr.rel (0) target = $region49
  $region48: #{bcmlp_actor_forward.1} parent=0 // pred_region
    _
  $region49: #{bcmlp_actor_forward.1} parent=0 // pred_fallthru
    _
  // Predicated region
  $region50: #{bcmlp_actor_forward.1} parent=0 // pred_check
    _
  $region51: #{bcmlp_actor_forward.1} parent=0 // pred_check_branch
    %400 = sbr.rel (0) target = $region53
  $region52: #{bcmlp_actor_forward.1} parent=0 // pred_region
    _
  $region53: #{bcmlp_actor_forward.1} parent=0 // pred_fallthru
    _

</llo_original>
